<compile_context>
chip_gen: v5e
topology: v5e:2x2
jax: 0.10.0
libtpu: 0.0.40
codegen_flags: <defaults>
</compile_context>

<pallas_src>
import jax
import jax.numpy as jnp
from jax.experimental import pallas as pl
from jax.experimental.pallas import tpu as pltpu

EPS = 1e-10


def _l2norm_kernel(x_ref, w_ref, o_ref):
    # x_ref: (Bt, C, t_hw) block -- channels on sublanes, spatial on lanes.
    # w_ref: (C, 1) per-channel weight (same block every grid step).
    x = x_ref[...].astype(jnp.float32)
    w = w_ref[...].astype(jnp.float32)                        # (C, 1)
    sumsq = jnp.sum(x * x, axis=1, keepdims=True)             # (Bt, 1, t_hw)
    # Reference is x / (sqrt(sumsq) + eps): reciprocal of (sqrt + eps).
    # Exact reciprocal keeps reference-matching numerics; the kernel is
    # mem-bound so the small VPU/EUP cost is fully hidden behind the DMA.
    inv = pl.reciprocal(jnp.sqrt(sumsq) + EPS, approx=False)
    o_ref[...] = (x * inv * w[None, :, :]).astype(o_ref.dtype)


def l2norm_pallas(x_nchw, weight, *, target_block_bytes=None):
    """x_nchw: (B, C, H, W); weight: (C,). Returns (B, C, H, W)."""
    B, C, H, W = x_nchw.shape
    HW = H * W

    # Generation-aware VMEM budget: v5e/v6e have 128 MiB physical VMEM ->
    # allow bigger blocks / scoped limit; v7x (64 MiB) keeps the conservative
    # defaults. Explicit target_block_bytes always wins (useful for tests).
    vmem_limit = 32 * 1024 * 1024
    default_block_bytes = 4 * 1024 * 1024
    try:
        info = pltpu.get_tpu_info()
        if getattr(info, "vmem_capacity_bytes", 0) >= 128 * 1024 * 1024:
            default_block_bytes = 8 * 1024 * 1024
            vmem_limit = 64 * 1024 * 1024
    except Exception:
        pass
    if target_block_bytes is None:
        target_block_bytes = default_block_bytes

    # Budget blocks against the in-kernel f32 working set (4 B/elem), not the
    # HBM itemsize, so sub-32-bit inputs don't blow VMEM after the upcast.
    elems_budget = max(target_block_bytes // 4, 128)

    x3d = x_nchw.reshape(B, C, HW)            # free: contiguous NCHW reshape
    w2d = weight.reshape(C, 1)
    per_batch_elems = C * HW

    single_spatial_tile = per_batch_elems <= elems_budget
    if single_spatial_tile and B == 1 and HW >= 256:
        # v7x megacore: with only one batch element, lane-tile instead so the
        # grid has >= 2 steps and both TensorCores get work.
        single_spatial_tile = False

    if single_spatial_tile:
        # Small-C / small-HW regime: one block covers all of (C, HW). The last
        # two block dims equal the full array dims -> no (8,128) divisibility
        # requirement and no padding. Block over batch to keep blocks big.
        Bt = max(1, min(B, elems_budget // per_batch_elems))
        if B > 1:
            Bt = min(Bt, pl.cdiv(B, 2))       # keep >= 2 grid steps (v7x)
        grid = (pl.cdiv(B, Bt),)
        x_spec = pl.BlockSpec((Bt, C, HW), lambda b: (b, 0, 0))
        w_spec = pl.BlockSpec((C, 1), lambda b: (0, 0))
        o_spec = pl.BlockSpec((Bt, C, HW), lambda b: (b, 0, 0))
        dims = ("parallel",)
    else:
        # Large regime: lane-tile HW in multiples of 128; Pallas clips the
        # partial edge block (no wrapper pad/slice -> no extra HBM passes).
        # TODO(synk): also tile over C for extreme channel counts (block is
        # at least C*128*4 B); irrelevant at the SSD default C=512.
        t_hw = max(128, (elems_budget // C) // 128 * 128)
        t_hw = min(t_hw, pl.cdiv(HW, 128) * 128)
        if B == 1 and t_hw > 128 and pl.cdiv(HW, t_hw) < 2:
            # v7x megacore: split the lone spatial tile across both cores.
            t_hw = max(128, pl.cdiv(t_hw // 2, 128) * 128)
        grid = (B, pl.cdiv(HW, t_hw))
        x_spec = pl.BlockSpec((1, C, t_hw), lambda b, j: (b, 0, j))
        w_spec = pl.BlockSpec((C, 1), lambda b, j: (0, 0))
        o_spec = pl.BlockSpec((1, C, t_hw), lambda b, j: (b, 0, j))
        dims = ("parallel", "parallel")

    out3d = pl.pallas_call(
        _l2norm_kernel,
        out_shape=jax.ShapeDtypeStruct((B, C, HW), x_nchw.dtype),
        grid_spec=pltpu.PrefetchScalarGridSpec(
            num_scalar_prefetch=0,
            grid=grid,
            in_specs=[x_spec, w_spec],
            out_specs=o_spec,
        ),
        compiler_params=pltpu.CompilerParams(
            dimension_semantics=dims,
            vmem_limit_bytes=vmem_limit,
        ),
    )(x3d, w2d)

    return out3d.reshape(B, C, H, W)


def l2norm_ref(x_nchw, weight):
    """Pure-JAX reference matching the PyTorch forward exactly."""
    norm = jnp.sqrt(jnp.sum(x_nchw ** 2, axis=1, keepdims=True)) + EPS
    x = x_nchw / norm
    w = weight.reshape(1, -1, 1, 1)
    return w * x


if __name__ == "__main__":
    key = jax.random.PRNGKey(0)

    # --- Test 1: small shapes consistent with the module (batch blocking /
    # single-spatial-tile path), weight = scale (matches reset_parameters()).
    B, C, H, W = 2, 4, 16, 16
    scale = 20.0
    x = jax.random.normal(key, (B, C, H, W), dtype=jnp.float32)
    weight = jnp.full((C,), scale, dtype=jnp.float32)

    out = jax.block_until_ready(l2norm_pallas(x, weight))
    ref = l2norm_ref(x, weight)
    assert out.shape == (B, C, H, W)
    assert jnp.allclose(out, ref, atol=1e-5, rtol=1e-5), "mismatch vs reference"

    # --- Test 2: exercise the lane-tiled path with a non-128-divisible H*W
    # (partial edge block clipped by Pallas, no wrapper pad/slice) by forcing
    # a tiny block budget.
    B2, C2, H2, W2 = 2, 8, 13, 17
    k1, k2 = jax.random.split(key)
    x2 = jax.random.normal(k1, (B2, C2, H2, W2), dtype=jnp.float32)
    w2 = jnp.linspace(0.5, 2.0, C2, dtype=jnp.float32)

    out2 = jax.block_until_ready(
        l2norm_pallas(x2, w2, target_block_bytes=2048))
    ref2 = l2norm_ref(x2, w2)
    assert out2.shape == (B2, C2, H2, W2)
    assert jnp.allclose(out2, ref2, atol=1e-5, rtol=1e-5), "edge-block mismatch"

    print("KERNEL_OK")
</pallas_src>

<mosaic_0001>
module attributes {stable_mosaic.version = 11 : i64} {
  func.func @_l2norm_kernel(%arg0: i32, %arg1: memref<1x4x256xf32, #tpu.memory_space<vmem>>, %arg2: memref<4x1xf32, #tpu.memory_space<vmem>>, %arg3: memref<1x4x256xf32, #tpu.memory_space<vmem>>) attributes {dimension_semantics = [#tpu.dimension_semantics<parallel>], iteration_bounds = array<i64: 2>, scalar_prefetch = 0 : i64, scratch_operands = 0 : i64, tpu.core_type = #tpu.core_type<tc>, window_params = [{transform_indices = @transform_0, window_bounds = array<i64: 1, 4, 256>}, {pipeline_mode = #tpu.pipeline_mode<synchronous>, transform_indices = @transform_1, window_bounds = array<i64: 4, 1>}, {transform_indices = @transform_2, window_bounds = array<i64: 1, 4, 256>}]} {
    %c0 = arith.constant 0 : index
    %c0_0 = arith.constant 0 : index
    %c0_1 = arith.constant 0 : index
    %0 = vector.load %arg1[%c0, %c0_0, %c0_1] : memref<1x4x256xf32, #tpu.memory_space<vmem>>, vector<1x4x256xf32>
    %c0_2 = arith.constant 0 : index
    %c0_3 = arith.constant 0 : index
    %1 = vector.load %arg2[%c0_2, %c0_3] : memref<4x1xf32, #tpu.memory_space<vmem>>, vector<4x1xf32>
    %2 = arith.mulf %0, %0 : vector<1x4x256xf32>
    %cst = arith.constant dense<0.000000e+00> : vector<1x256xf32>
    %3 = vector.multi_reduction <add>, %2, %cst [1] : vector<1x4x256xf32> to vector<1x256xf32>
    %4 = vector.shape_cast %3 : vector<1x256xf32> to vector<1x1x256xf32>
    %5 = math.sqrt %4 : vector<1x1x256xf32>
    %cst_4 = arith.constant 1.000000e-10 : f32
    %6 = vector.broadcast %cst_4 : f32 to vector<1x1x256xf32>
    %7 = arith.addf %5, %6 : vector<1x1x256xf32>
    %8 = tpu.reciprocal %7 : vector<1x1x256xf32> -> vector<1x1x256xf32>
    %9 = vector.broadcast %8 : vector<1x1x256xf32> to vector<1x4x256xf32>
    %10 = arith.mulf %0, %9 : vector<1x4x256xf32>
    %11 = vector.shape_cast %1 : vector<4x1xf32> to vector<1x4x1xf32>
    %12 = vector.broadcast %11 : vector<1x4x1xf32> to vector<1x4x256xf32>
    %13 = arith.mulf %10, %12 : vector<1x4x256xf32>
    %c0_5 = arith.constant 0 : index
    %c0_6 = arith.constant 0 : index
    %c0_7 = arith.constant 0 : index
    %14 = vector.load %arg3[%c0_5, %c0_6, %c0_7] : memref<1x4x256xf32, #tpu.memory_space<vmem>>, vector<1x4x256xf32>
    tpu.vector_store %arg3[%c0_5, %c0_6, %c0_7], %13 {strides = array<i32>} : memref<1x4x256xf32, #tpu.memory_space<vmem>>, vector<1x4x256xf32>,
    return
  }
  func.func @transform_0(%arg0: i32) -> (i32, i32, i32) {
    %c0_i32 = arith.constant 0 : i32
    %c0_i32_0 = arith.constant 0 : i32
    %c0_i32_1 = arith.constant 0 : i32
    return %arg0, %c0_i32, %c0_i32_0 : i32, i32, i32
  }
  func.func @transform_1(%arg0: i32) -> (i32, i32) {
    %c0_i32 = arith.constant 0 : i32
    %c0_i32_0 = arith.constant 0 : i32
    %c0_i32_1 = arith.constant 0 : i32
    return %c0_i32, %c0_i32_0 : i32, i32
  }
  func.func @transform_2(%arg0: i32) -> (i32, i32, i32) {
    %c0_i32 = arith.constant 0 : i32
    %c0_i32_0 = arith.constant 0 : i32
    %c0_i32_1 = arith.constant 0 : i32
    return %arg0, %c0_i32, %c0_i32_0 : i32, i32, i32
  }
}

</mosaic_0001>

<llo_original>
// kernel: tpu_custom_call.1
$region0: #{tpu_custom_call.1}
  #allocation0 [shape = 'u32[]', space=smem, size = 0x4, offset = 0x4, fixed_abs, tag = 'smem constant byte address 0x4 - core index']
  #allocation1 [shape = 'u32[72,128]{1,0:T(1,128)}', space=vmem, size = 0x9000, scoped, tag = 'internal scratch']
  %s0 = inlined_call_operand.hbm [shape: f32[2,4,256], index: 0, kind: input, shape index: {}]
  %s1 = inlined_call_operand.vmem [shape: f32[4,1], index: 1, kind: input, shape index: {}]
  %s2 = inlined_call_operand.hbm [shape: f32[2,4,256], index: 2, kind: output, shape index: {}]
  %s3 = sld [smem:[#allocation0]]
  $region45: #{tpu_custom_call.1} parent=0
    _
  %s5 = ssub.s32 1, %s3
  %s6 = scalar_select 0, %s5, %s3
  $region1: #{tpu_custom_call.1} parent=0
    #allocation2 [shape = 'u8[8192]{0}', space=vmem, size = 0x2000, scoped, tag = 'input window, operand 0']
    #allocation3 [shape = 's32[2]{0}', space=sflag, size = 0x8, scoped, tag = 'scoped memory for tpu_custom_call.1']
    #allocation4 [shape = 's32[2]{0}', space=sflag, size = 0x8, scoped, tag = 'scoped memory for tpu_custom_call.1']
    #allocation5 [shape = 'u8[8192]{0}', space=vmem, size = 0x2000, scoped, tag = 'output window, operand 0']
    %7 = vsyncpa [#allocation3], 0
    %s8 = scalar_lea.sflag [#allocation3], 1
    %9 = vsyncpa %s8, 0
    %10 = vsyncpa [#allocation4], 0
    %s11 = scalar_lea.sflag [#allocation4], 1
    %12 = vsyncpa %s11, 0
    loop: start=0, step=1, limit=4
    $region2: #{tpu_custom_call.1} parent=1 // loop_pre_header
      _
    $region3: #{tpu_custom_call.1} parent=1 // loop_header
      %s14 = sphi 0, %s18
      %p15 = scmp.ge.s32.totalorder %s14, 4
      %s24 = sphi 0, %s26
      %s27 = sphi 0, %s24
      %s28 = sphi 0, %s27
      %s44 = sphi 0, %s28
      %s48 = sphi 0, %s48
      %s50 = sphi 0, %s48
      %s51 = sphi 0, %s50
      %s65 = sphi 0, %s51
      %s71 = sphi 0, %s73
      %s74 = sphi 0, %s71
      %s75 = sphi 0, %s74
      %s91 = sphi 0, %s75
    $region4: #{tpu_custom_call.1} parent=1 // loop_header_branch
      %17 = sbr.rel (%p15) target = $region8
    $region5: #{tpu_custom_call.1} parent=1 // loop_body
      %s19 = ssub.s32 %s14, 1
      %s20 = ssub.s32 %s14, 2
      %s21 = sadd.s32 %s14, 1
      %s22 = ssub.s32 %s14, %s21
      %p23 = scmp.eq.s32.totalorder %s22, 0
      %s25 = sadd.s32 %s24, 1
      %s26 = scalar_select %p23, %s24, %s25
      %p29 = pneg %p23
      %p30 = scmp.eq.s32.totalorder %s14, 1
      %p31 = por %p29, %p30
      %p32 = scmp.ne.s32.totalorder %s24, %s27
      %p33 = scmp.eq.s32.totalorder %s14, 0
      %p34 = por %p32, %p33
      %p35 = scmp.ne.s32.totalorder %s24, %s27
      %p36 = scmp.eq.s32.totalorder %s19, 1
      %p37 = por %p35, %p36
      %p38 = scmp.ne.s32.totalorder %s27, %s28
      %p39 = scmp.eq.s32.totalorder %s19, 0
      %p40 = por %p38, %p39
      %p41 = scmp.ne.s32.totalorder %s27, %s28
      %p42 = scmp.eq.s32.totalorder %s20, 1
      %p43 = por %p41, %p42
      %p45 = scmp.ne.s32.totalorder %s28, %s44
      %p46 = scmp.eq.s32.totalorder %s20, 0
      %p47 = por %p45, %p46
      %s49 = sadd.s32 %s48, 1
      %p52 = scmp.eq.s32.totalorder %s14, 1
      %p53 = scmp.ne.s32.totalorder %s48, %s50
      %p54 = scmp.eq.s32.totalorder %s14, 0
      %p55 = por %p53, %p54
      %p56 = scmp.ne.s32.totalorder %s48, %s50
      %p57 = scmp.eq.s32.totalorder %s19, 1
      %p58 = por %p56, %p57
      %p59 = scmp.ne.s32.totalorder %s50, %s51
      %p60 = scmp.eq.s32.totalorder %s19, 0
      %p61 = por %p59, %p60
      %p62 = scmp.ne.s32.totalorder %s50, %s51
      %p63 = scmp.eq.s32.totalorder %s20, 1
      %p64 = por %p62, %p63
      %p66 = scmp.ne.s32.totalorder %s51, %s65
      %p67 = scmp.eq.s32.totalorder %s20, 0
      %p68 = por %p66, %p67
      %s69 = ssub.s32 %s14, %s21
      %p70 = scmp.eq.s32.totalorder %s69, 0
      %s72 = sadd.s32 %s71, 1
      %s73 = scalar_select %p70, %s71, %s72
      %p76 = pneg %p70
      %p77 = scmp.eq.s32.totalorder %s14, 1
      %p78 = por %p76, %p77
      %p79 = scmp.ne.s32.totalorder %s71, %s74
      %p80 = scmp.eq.s32.totalorder %s14, 0
      %p81 = por %p79, %p80
      %p82 = scmp.ne.s32.totalorder %s71, %s74
      %p83 = scmp.eq.s32.totalorder %s19, 1
      %p84 = por %p82, %p83
      %p85 = scmp.ne.s32.totalorder %s74, %s75
      %p86 = scmp.eq.s32.totalorder %s19, 0
      %p87 = por %p85, %p86
      %p88 = scmp.ne.s32.totalorder %s74, %s75
      %p89 = scmp.eq.s32.totalorder %s20, 1
      %p90 = por %p88, %p89
      %p92 = scmp.ne.s32.totalorder %s75, %s91
      %p93 = scmp.eq.s32.totalorder %s20, 0
      %p94 = por %p92, %p93
      %p95 = scmp.le.s32.totalorder 1, %s14
      %p96 = scmp.lt.s32.totalorder %s14, 3
      %p97 = pnand %p95, %p96
      %p98 = pneg %p97
      // Predicated region
      $region9: #{tpu_custom_call.1} parent=5 // pred_check
        _
      $region10: #{tpu_custom_call.1} parent=5 // pred_check_branch
        %100 = sbr.rel (%p97) target = $region12
      $region11: #{tpu_custom_call.1} parent=5 // pred_region
        %s101 = ssub.s32 %s14, 1
        // Predicated region
        $region13: #{tpu_custom_call.1} parent=11 // pred_check
          %p102 = pneg %p61
        $region14: #{tpu_custom_call.1} parent=11 // pred_check_branch
          %104 = sbr.rel (%p102) target = $region16
        $region15: #{tpu_custom_call.1} parent=11 // pred_region
          _
        $region16: #{tpu_custom_call.1} parent=11 // pred_fallthru
          _
      $region12: #{tpu_custom_call.1} parent=5 // pred_fallthru
        _
      %p105 = scmp.lt.s32.totalorder %s14, 2
      // Predicated region
      $region17: #{tpu_custom_call.1} parent=5 // pred_check
        %p106 = pneg %p105
      $region18: #{tpu_custom_call.1} parent=5 // pred_check_branch
        %108 = sbr.rel (%p106) target = $region20
      $region19: #{tpu_custom_call.1} parent=5 // pred_region
        // Predicated region
        $region21: #{tpu_custom_call.1} parent=19 // pred_check
          %p109 = pneg %p34
        $region22: #{tpu_custom_call.1} parent=19 // pred_check_branch
          %111 = sbr.rel (%p109) target = $region24
        $region23: #{tpu_custom_call.1} parent=19 // pred_region
          %s112 = sand.u32 %s24, 1
          %s113 = scalar_lea.sflag [#allocation3], %s112
          %s114 = sand.u32 %s24, 1
          %s115 = smul.addr %s114, 8
          %s116 = scalar_lea.vmem [#allocation2], %s115
          %118 = vsyncadd %s113, 0
          %s119 = smul.addr %s14, 2
          %s120 = smul.addr %s119, 4
          %s121 = scalar_lea.hbm %s0, %s120
          %s123 = sshll.u32 %s121, 4
          %s124 = int_to_ptr.hbm [resolvable:$true] %s123
          %s125 = sshll.u32 %s116, 4
          %s126 = int_to_ptr.vmem [resolvable:$true] %s125
          %128 = dma.hbm_to_vmem [thread:$0]  %s124, 128, %s126, %s113
        $region24: #{tpu_custom_call.1} parent=19 // pred_fallthru
          _
      $region20: #{tpu_custom_call.1} parent=5 // pred_fallthru
        _
      %p129 = scmp.le.s32.totalorder 1, %s14
      %p130 = scmp.lt.s32.totalorder %s14, 3
      %p131 = pnand %p129, %p130
      %p132 = pneg %p131
      // Predicated region
      $region25: #{tpu_custom_call.1} parent=5 // pred_check
        _
      $region26: #{tpu_custom_call.1} parent=5 // pred_check_branch
        %134 = sbr.rel (%p131) target = $region28
      $region27: #{tpu_custom_call.1} parent=5 // pred_region
        %s135 = ssub.s32 %s14, 1
        %s136 = sand.u32 %s27, 1
        %s137 = scalar_lea.sflag [#allocation3], %s136
        %s138 = sand.u32 %s27, 1
        %s139 = smul.addr %s138, 8
        %s140 = scalar_lea.vmem [#allocation2], %s139
        // Predicated region
        $region29: #{tpu_custom_call.1} parent=27 // pred_check
          %p141 = pneg %p40
        $region30: #{tpu_custom_call.1} parent=27 // pred_check_branch
          %143 = sbr.rel (%p141) target = $region32
        $region31: #{tpu_custom_call.1} parent=27 // pred_region
          %145 = dma.done %s137, 128
        $region32: #{tpu_custom_call.1} parent=27 // pred_fallthru
          _
        %s146 = sand.u32 %s27, 1
        %s147 = scalar_lea.sflag [#allocation3], %s146
        %s148 = sand.u32 %s27, 1
        %s149 = smul.addr %s148, 8
        %s150 = scalar_lea.vmem [#allocation2], %s149
        %p151 = pneg %p40
        %p152 = pneg %p37
        %p153 = pneg %p61
        %p154 = pneg %p58
        %p155 = pneg %p87
        %p156 = pneg %p84
        %s157 = sand.u32 %s74, 1
        %s158 = scalar_lea.sflag [#allocation4], %s157
        %s159 = sand.u32 %s74, 1
        %s160 = smul.addr %s159, 8
        %s161 = scalar_lea.vmem [#allocation5], %s160
        %v162 = vld [vmem:[%s140] sm:$0xff]
        %v163 = vld [vmem:[%s1] sm:$0xf]
        %v164 = vmul.f32 %v162, %v162
        %166 = vst [vmem:[#allocation1] ss:$2 sm:$0xff] %v164
        %v167 = vld.sshfl [vmem:[#allocation1] sm:$0xff pattern:$0x75316420]
        %v168 = vld.sshfl [vmem:[#allocation1 + $0x8] sm:$0xff pattern:$0x75316420]
        %vm171 = vcmask 1043456
        %v172 = vsel %vm171, %v167, 0.0
        %v173 = vrot.slane %v172, 4
        %v174 = vadd.f32 %v172, %v173
        %v175 = vrot.slane %v174, 2
        %v176 = vadd.f32 %v174, %v175
        %v177 = vrot.slane %v176, 1
        %v178 = vadd.f32 %v176, %v177
        %v179 = vsel %vm171, %v168, 0.0
        %v180 = vrot.slane %v179, 4
        %v181 = vadd.f32 %v179, %v180
        %v182 = vrot.slane %v181, 2
        %v183 = vadd.f32 %v181, %v182
        %v184 = vrot.slane %v183, 1
        %v185 = vadd.f32 %v183, %v184
        %v186 = vrsqrt.pop %v178
        %v187 = vmul.f32 %v186, %v178
        %v188 = vmul.f32 %v187, %v186
        %v189 = vmul.f32 0.5, %v188
        %v190 = vsub.f32 1.5, %v189
        %v191 = vmul.f32 %v186, %v190
        %v192 = vmul.f32 %v178, %v191
        %vm193 = vcmp.eq.f32.partialorder %v178, inf
        %v194 = vsel %vm193, %v178, %v192
        %vm195 = vcmp.eq.f32.partialorder %v178, 0.0
        %v196 = vand.u32 %v178, 2147483648
        %v197 = vsel %vm195, %v196, %v194
        %v198 = vrsqrt.pop %v185
        %v199 = vmul.f32 %v198, %v185
        %v200 = vmul.f32 %v199, %v198
        %v201 = vmul.f32 0.5, %v200
        %v202 = vsub.f32 1.5, %v201
        %v203 = vmul.f32 %v198, %v202
        %v204 = vmul.f32 %v185, %v203
        %vm205 = vcmp.eq.f32.partialorder %v185, inf
        %v206 = vsel %vm205, %v185, %v204
        %vm207 = vcmp.eq.f32.partialorder %v185, 0.0
        %v208 = vand.u32 %v185, 2147483648
        %v209 = vsel %vm207, %v208, %v206
        %v210 = vadd.f32 %v197, 1e-10
        %v211 = vadd.f32 %v209, 1e-10
        %v212 = vrcp.pop %v210
        %v213 = vmul.f32 %v210, %v212
        %v214 = vsub.f32 1.0, %v213
        %v215 = vmul.f32 %v212, %v214
        %v216 = vadd.f32 %v212, %v215
        %vm217 = vweird.f32 %v210
        %vm218 = vweird.f32 %v212
        %vm219 = vmor %vm217, %vm218
        %v220 = vsel %vm219, %v212, %v216
        %v221 = vand.u32 2147483647, %v210
        %vm222 = vcmp.eq.f32.partialorder %v221, 8.507059e+37
        %v223 = vand.u32 %v210, 2147483648
        %v224 = vor.u32 1.1754944e-38, %v223
        %v225 = vsel %vm222, %v224, %v220
        %v226 = vrcp.pop %v211
        %v227 = vmul.f32 %v211, %v226
        %v228 = vsub.f32 1.0, %v227
        %v229 = vmul.f32 %v226, %v228
        %v230 = vadd.f32 %v226, %v229
        %vm231 = vweird.f32 %v211
        %vm232 = vweird.f32 %v226
        %vm233 = vmor %vm231, %vm232
        %v234 = vsel %vm233, %v226, %v230
        %v235 = vand.u32 2147483647, %v211
        %vm236 = vcmp.eq.f32.partialorder %v235, 8.507059e+37
        %v237 = vand.u32 %v211, 2147483648
        %v238 = vor.u32 1.1754944e-38, %v237
        %v239 = vsel %vm236, %v238, %v234
        %v242 = vrot.slane %v239, 4
        %v243 = vsel %vm171, %v225, %v242
        %v245 = vmul.f32 %v162, %v243
        %247 = vset.pattern.permute.xlu0 0
        %248 = vperm.xlu0 %247, %v163
        %v249 = vpop.permute.xlu0 %248
        %v251 = vunpack.c.l.s4 839922192
        %v252 = vunpack.c.0.s8 %v251
        %v253 = vperm.slane %v249, %v252
        %v255 = vmul.f32 %v245, %v253
        %256 = vst [vmem:[%s161] sm:$0xff] %v255
        %s257 = sand.u32 %s74, 1
        %s258 = scalar_lea.sflag [#allocation4], %s257
        %s259 = sand.u32 %s74, 1
        %s260 = smul.addr %s259, 8
        %s261 = scalar_lea.vmem [#allocation5], %s260
        // Predicated region
        $region33: #{tpu_custom_call.1} parent=27 // pred_check
          %p262 = pneg %p84
        $region34: #{tpu_custom_call.1} parent=27 // pred_check_branch
          %264 = sbr.rel (%p262) target = $region36
        $region35: #{tpu_custom_call.1} parent=27 // pred_region
          %266 = vsyncadd %s258, 0
          %s267 = smul.addr %s19, 2
          %s268 = smul.addr %s267, 4
          %s269 = scalar_lea.hbm %s2, %s268
          %s271 = sshll.u32 %s261, 4
          %s272 = int_to_ptr.vmem [resolvable:$true] %s271
          %s273 = sshll.u32 %s269, 4
          %s274 = int_to_ptr.hbm [resolvable:$true] %s273
          %276 = dma.vmem_to_hbm [thread:$0]  %s272, 128, %s274, %s258
        $region36: #{tpu_custom_call.1} parent=27 // pred_fallthru
          _
      $region28: #{tpu_custom_call.1} parent=5 // pred_fallthru
        _
      %p277 = scmp.le.s32.totalorder 2, %s14
      // Predicated region
      $region37: #{tpu_custom_call.1} parent=5 // pred_check
        %p278 = pneg %p277
      $region38: #{tpu_custom_call.1} parent=5 // pred_check_branch
        %280 = sbr.rel (%p278) target = $region40
      $region39: #{tpu_custom_call.1} parent=5 // pred_region
        %s281 = ssub.s32 %s14, 2
        // Predicated region
        $region41: #{tpu_custom_call.1} parent=39 // pred_check
          %p282 = pneg %p90
        $region42: #{tpu_custom_call.1} parent=39 // pred_check_branch
          %284 = sbr.rel (%p282) target = $region44
        $region43: #{tpu_custom_call.1} parent=39 // pred_region
          %s285 = sand.u32 %s75, 1
          %s286 = scalar_lea.sflag [#allocation4], %s285
          %s287 = sand.u32 %s75, 1
          %s288 = smul.addr %s287, 8
          %s289 = scalar_lea.vmem [#allocation5], %s288
          %291 = dma.done %s286, 128
        $region44: #{tpu_custom_call.1} parent=39 // pred_fallthru
          _
      $region40: #{tpu_custom_call.1} parent=5 // pred_fallthru
        _
    $region6: #{tpu_custom_call.1} parent=1 // loop_footer
      %s18 = sadd.s32 1, %s14
    $region7: #{tpu_custom_call.1} parent=1 // loop_footer_branch
      %13 = sbr.rel target = $region3
    $region8: #{tpu_custom_call.1} parent=1 // loop_exit
      _
    %292 = vsyncpa [#allocation3], 1
    %s293 = scalar_lea.sflag [#allocation3], 1
    %294 = vsyncpa %s293, 1
    %295 = vsyncpa [#allocation4], 1
    %s296 = scalar_lea.sflag [#allocation4], 1
    %297 = vsyncpa %s296, 1

</llo_original>
